<compile_context>
chip_gen: v5e
topology: v5e:2x2
jax: 0.10.0
libtpu: 0.0.40
codegen_flags: <defaults>
</compile_context>

<pallas_src>
import functools

import jax
import jax.numpy as jnp
from jax.experimental import pallas as pl
from jax.experimental.pallas import tpu as pltpu

_EPS = 1e-5
_BATCH_PACK_THRESHOLD = 1 * 1024 * 1024  # per-image bytes below which we pack batch


# ---------------------------------------------------------------------------
# Kernels: blocks are (TB, C, T); reduction over axis=1 (channels / sublanes).
# ---------------------------------------------------------------------------
def _withbias_kernel(x_ref, w_ref, b_ref, o_ref):
    x = x_ref[...].astype(jnp.float32)                      # (TB, C, T)
    inv_c = 1.0 / x.shape[1]
    mu = jnp.sum(x, axis=1, keepdims=True) * inv_c          # (TB, 1, T)
    xc = x - mu
    var = jnp.sum(xc * xc, axis=1, keepdims=True) * inv_c   # unbiased=False
    inv = jax.lax.rsqrt(var + _EPS)
    # Note: on v7x with bf16 I/O the epilogue could run in bf16 to save VALU
    # slots; kept in f32 here for accuracy and v5e compatibility.
    o_ref[...] = (xc * (inv * w_ref[...]) + b_ref[...]).astype(o_ref.dtype)


def _biasfree_kernel(x_ref, w_ref, o_ref):
    x = x_ref[...].astype(jnp.float32)                      # (TB, C, T)
    inv_c = 1.0 / x.shape[1]
    mu = jnp.sum(x, axis=1, keepdims=True) * inv_c
    ex2 = jnp.sum(x * x, axis=1, keepdims=True) * inv_c
    # torch.var(unbiased=False) subtracts the mean for the variance even in the
    # BiasFree LN; only the normalization itself skips the mean subtraction.
    var = jnp.maximum(ex2 - mu * mu, 0.0)                   # guard tiny cancellation
    inv = jax.lax.rsqrt(var + _EPS)
    o_ref[...] = (x * (inv * w_ref[...])).astype(o_ref.dtype)


# ---------------------------------------------------------------------------
# Chip-aware VMEM budget.
# ---------------------------------------------------------------------------
@functools.lru_cache(maxsize=1)
def _vmem_config():
    """Returns (vmem_limit_bytes, per-buffer tile budget in bytes)."""
    # v7x-safe defaults (64 MiB VMEM per TensorCore): do not over-raise there.
    limit, tile_budget = 40 * 1024 * 1024, 4 * 1024 * 1024
    try:
        info = pltpu.get_tpu_info()
        cap = getattr(info, "vmem_capacity_bytes", None)
        if cap is not None and cap >= 96 * 1024 * 1024:
            # v5e / v6e: 128 MiB physical VMEM -> bigger tiles, fewer steps.
            limit, tile_budget = 64 * 1024 * 1024, 8 * 1024 * 1024
    except Exception:
        pass
    return limit, tile_budget


# ---------------------------------------------------------------------------
# Tiling heuristics.
# ---------------------------------------------------------------------------
def _choose_batch_tiles(b, c, hw, itemsize, tile_budget_bytes):
    """Pack several (C, HW) images per grid step for small feature maps."""
    per_image = max(1, c * hw * itemsize)
    max_tb = max(1, tile_budget_bytes // per_image)
    min_total_steps = 8                       # pipeline steady-state + 2 v7x TCs
    n_steps = max(pl.cdiv(b, max_tb), min(b, min_total_steps))
    tb = pl.cdiv(b, n_steps)
    n_steps = pl.cdiv(b, tb)                  # balanced
    return tb, n_steps


def _choose_hw_tiles(b, c, hw, itemsize, tile_budget_bytes):
    """Lane-dense, balanced tiles along H*W with enough total grid steps."""
    max_lanes = tile_budget_bytes // max(1, c * itemsize)
    max_lanes = max(256, (max_lanes // 128) * 128)
    min_total_steps = 8                       # >= ~4 steps per v7x TensorCore
    want_tiles = pl.cdiv(min_total_steps, b)
    max_useful_tiles = max(1, hw // 512)      # never shrink tiles below ~512 lanes
    n_tiles = max(pl.cdiv(hw, max_lanes), min(want_tiles, max_useful_tiles))
    # Balance: no tiny masked tail tile; keep lanes 128-aligned.
    tile_hw = min(hw, ((pl.cdiv(hw, n_tiles) + 127) // 128) * 128)
    n_tiles = pl.cdiv(hw, tile_hw)
    return tile_hw, n_tiles


# ---------------------------------------------------------------------------
# Public entry point (matches the PyTorch LayerNorm module's forward).
# ---------------------------------------------------------------------------
@functools.partial(jax.jit, static_argnames=("layer_norm_type",))
def layer_norm(x, weight, bias=None, *, layer_norm_type="WithBias"):
    """x: (B, C, H, W) NCHW. weight/bias: (C,). Returns NCHW, same dtype as x."""
    b, c, h, w = x.shape
    hw = h * w
    x3 = x.reshape(b, c, hw)                  # free reshape, no transpose
    itemsize = x.dtype.itemsize
    vmem_limit, tile_budget = _vmem_config()

    per_image = c * hw * itemsize
    if per_image <= _BATCH_PACK_THRESHOLD:
        # Small feature maps: pack multiple batch images per grid step.
        tb, n_steps = _choose_batch_tiles(b, c, hw, itemsize, tile_budget)
        grid = (n_steps,)
        x_spec = pl.BlockSpec((tb, c, hw), lambda i: (i, 0, 0))
        p_spec = pl.BlockSpec((1, c, 1), lambda i: (0, 0, 0))
        o_spec = pl.BlockSpec((tb, c, hw), lambda i: (i, 0, 0))
        semantics = ("parallel",)
    else:
        # Large feature maps: tile the lane (H*W) axis, one image per step.
        tile_hw, n_tiles = _choose_hw_tiles(b, c, hw, itemsize, tile_budget)
        grid = (b, n_tiles)
        x_spec = pl.BlockSpec((1, c, tile_hw), lambda i, j: (i, 0, j))
        p_spec = pl.BlockSpec((1, c, 1), lambda i, j: (0, 0, 0))
        o_spec = pl.BlockSpec((1, c, tile_hw), lambda i, j: (i, 0, j))
        semantics = ("parallel", "parallel")

    w_col = weight.astype(jnp.float32).reshape(1, c, 1)

    if layer_norm_type == "BiasFree":
        kernel = _biasfree_kernel
        args = (x3, w_col)
        in_specs = [x_spec, p_spec]
    else:
        kernel = _withbias_kernel
        b_col = bias.astype(jnp.float32).reshape(1, c, 1)
        args = (x3, w_col, b_col)
        in_specs = [x_spec, p_spec, p_spec]

    y3 = pl.pallas_call(
        kernel,
        out_shape=jax.ShapeDtypeStruct((b, c, hw), x.dtype),
        grid=grid,
        in_specs=in_specs,
        out_specs=o_spec,
        compiler_params=pltpu.CompilerParams(
            dimension_semantics=semantics,
            vmem_limit_bytes=vmem_limit,
        ),
    )(*args)

    return y3.reshape(b, c, h, w)


# ---------------------------------------------------------------------------
# Pure-JAX reference (mirrors the PyTorch module).
# ---------------------------------------------------------------------------
def _reference(x, weight, bias, layer_norm_type):
    b, c, h, w = x.shape
    x3 = jnp.transpose(x, (0, 2, 3, 1)).reshape(b, h * w, c).astype(jnp.float32)
    mu = jnp.mean(x3, axis=-1, keepdims=True)
    var = jnp.var(x3, axis=-1, keepdims=True)
    w32 = weight.astype(jnp.float32)
    if layer_norm_type == "BiasFree":
        y3 = x3 / jnp.sqrt(var + _EPS) * w32
    else:
        y3 = (x3 - mu) / jnp.sqrt(var + _EPS) * w32 + bias.astype(jnp.float32)
    return jnp.transpose(y3.reshape(b, h, w, c), (0, 3, 1, 2)).astype(x.dtype)


if __name__ == "__main__":
    key = jax.random.PRNGKey(0)

    # (B, C, H, W, dtype, atol, rtol)
    test_cases = [
        (2, 4, 16, 16, jnp.float32, 1e-4, 1e-4),    # tiny -> batch-packed path
        (1, 48, 96, 96, jnp.float32, 1e-4, 1e-4),   # HW-tiled path, balanced full tiles
        (1, 56, 80, 100, jnp.float32, 1e-4, 1e-4),  # HW-tiled path with masked tail tile
        (2, 8, 32, 48, jnp.bfloat16, 5e-2, 5e-2),   # bf16 I/O (itemsize-aware tiling)
    ]

    ok = True
    for (B, C, H, W, dtype, atol, rtol) in test_cases:
        key, kx, kw, kb = jax.random.split(key, 4)
        x = jax.random.normal(kx, (B, C, H, W), dtype=jnp.float32).astype(dtype)
        weight = 1.0 + 0.1 * jax.random.normal(kw, (C,), dtype=jnp.float32)
        bias = 0.1 * jax.random.normal(kb, (C,), dtype=jnp.float32)

        for ln_type in ("WithBias", "BiasFree"):
            out = jax.block_until_ready(
                layer_norm(x, weight, bias, layer_norm_type=ln_type)
            )
            ref = _reference(x, weight, bias, ln_type)
            if out.shape != (B, C, H, W) or out.dtype != x.dtype:
                ok = False
                continue
            good = jnp.allclose(
                out.astype(jnp.float32), ref.astype(jnp.float32),
                atol=atol, rtol=rtol,
            )
            if not bool(good):
                ok = False

    if ok:
        print("KERNEL_OK")
</pallas_src>

<mosaic_0001>
module attributes {stable_mosaic.version = 11 : i64} {
  func.func @_withbias_kernel(%arg0: i32, %arg1: memref<1x4x256xf32, #tpu.memory_space<vmem>>, %arg2: memref<1x4x1xf32, #tpu.memory_space<vmem>>, %arg3: memref<1x4x1xf32, #tpu.memory_space<vmem>>, %arg4: memref<1x4x256xf32, #tpu.memory_space<vmem>>) attributes {dimension_semantics = [#tpu.dimension_semantics<parallel>], iteration_bounds = array<i64: 2>, scalar_prefetch = 0 : i64, scratch_operands = 0 : i64, tpu.core_type = #tpu.core_type<tc>, window_params = [{transform_indices = @transform_0, window_bounds = array<i64: 1, 4, 256>}, {pipeline_mode = #tpu.pipeline_mode<synchronous>, transform_indices = @transform_1, window_bounds = array<i64: 1, 4, 1>}, {pipeline_mode = #tpu.pipeline_mode<synchronous>, transform_indices = @transform_2, window_bounds = array<i64: 1, 4, 1>}, {transform_indices = @transform_3, window_bounds = array<i64: 1, 4, 256>}]} {
    %c0 = arith.constant 0 : index
    %c0_0 = arith.constant 0 : index
    %c0_1 = arith.constant 0 : index
    %0 = vector.load %arg1[%c0, %c0_0, %c0_1] : memref<1x4x256xf32, #tpu.memory_space<vmem>>, vector<1x4x256xf32>
    %cst = arith.constant dense<0.000000e+00> : vector<1x256xf32>
    %1 = vector.multi_reduction <add>, %0, %cst [1] : vector<1x4x256xf32> to vector<1x256xf32>
    %2 = vector.shape_cast %1 : vector<1x256xf32> to vector<1x1x256xf32>
    %cst_2 = arith.constant 2.500000e-01 : f32
    %3 = vector.broadcast %cst_2 : f32 to vector<1x1x256xf32>
    %4 = arith.mulf %2, %3 : vector<1x1x256xf32>
    %5 = vector.broadcast %4 : vector<1x1x256xf32> to vector<1x4x256xf32>
    %6 = arith.subf %0, %5 : vector<1x4x256xf32>
    %7 = arith.mulf %6, %6 : vector<1x4x256xf32>
    %cst_3 = arith.constant dense<0.000000e+00> : vector<1x256xf32>
    %8 = vector.multi_reduction <add>, %7, %cst_3 [1] : vector<1x4x256xf32> to vector<1x256xf32>
    %9 = vector.shape_cast %8 : vector<1x256xf32> to vector<1x1x256xf32>
    %cst_4 = arith.constant 2.500000e-01 : f32
    %10 = vector.broadcast %cst_4 : f32 to vector<1x1x256xf32>
    %11 = arith.mulf %9, %10 : vector<1x1x256xf32>
    %cst_5 = arith.constant 9.99999974E-6 : f32
    %12 = vector.broadcast %cst_5 : f32 to vector<1x1x256xf32>
    %13 = arith.addf %11, %12 : vector<1x1x256xf32>
    %14 = math.rsqrt %13 : vector<1x1x256xf32>
    %c0_6 = arith.constant 0 : index
    %c0_7 = arith.constant 0 : index
    %c0_8 = arith.constant 0 : index
    %15 = vector.load %arg2[%c0_6, %c0_7, %c0_8] : memref<1x4x1xf32, #tpu.memory_space<vmem>>, vector<1x4x1xf32>
    %16 = vector.broadcast %14 : vector<1x1x256xf32> to vector<1x4x256xf32>
    %17 = vector.broadcast %15 : vector<1x4x1xf32> to vector<1x4x256xf32>
    %18 = arith.mulf %16, %17 : vector<1x4x256xf32>
    %19 = arith.mulf %6, %18 : vector<1x4x256xf32>
    %c0_9 = arith.constant 0 : index
    %c0_10 = arith.constant 0 : index
    %c0_11 = arith.constant 0 : index
    %20 = vector.load %arg3[%c0_9, %c0_10, %c0_11] : memref<1x4x1xf32, #tpu.memory_space<vmem>>, vector<1x4x1xf32>
    %21 = vector.broadcast %20 : vector<1x4x1xf32> to vector<1x4x256xf32>
    %22 = arith.addf %19, %21 : vector<1x4x256xf32>
    %c0_12 = arith.constant 0 : index
    %c0_13 = arith.constant 0 : index
    %c0_14 = arith.constant 0 : index
    %23 = vector.load %arg4[%c0_12, %c0_13, %c0_14] : memref<1x4x256xf32, #tpu.memory_space<vmem>>, vector<1x4x256xf32>
    tpu.vector_store %arg4[%c0_12, %c0_13, %c0_14], %22 {strides = array<i32>} : memref<1x4x256xf32, #tpu.memory_space<vmem>>, vector<1x4x256xf32>,
    return
  }
  func.func @transform_0(%arg0: i32) -> (i32, i32, i32) {
    %c0_i32 = arith.constant 0 : i32
    %c0_i32_0 = arith.constant 0 : i32
    %c0_i32_1 = arith.constant 0 : i32
    return %arg0, %c0_i32, %c0_i32_0 : i32, i32, i32
  }
  func.func @transform_1(%arg0: i32) -> (i32, i32, i32) {
    %c0_i32 = arith.constant 0 : i32
    %c0_i32_0 = arith.constant 0 : i32
    %c0_i32_1 = arith.constant 0 : i32
    %c0_i32_2 = arith.constant 0 : i32
    return %c0_i32, %c0_i32_0, %c0_i32_1 : i32, i32, i32
  }
  func.func @transform_2(%arg0: i32) -> (i32, i32, i32) {
    %c0_i32 = arith.constant 0 : i32
    %c0_i32_0 = arith.constant 0 : i32
    %c0_i32_1 = arith.constant 0 : i32
    %c0_i32_2 = arith.constant 0 : i32
    return %c0_i32, %c0_i32_0, %c0_i32_1 : i32, i32, i32
  }
  func.func @transform_3(%arg0: i32) -> (i32, i32, i32) {
    %c0_i32 = arith.constant 0 : i32
    %c0_i32_0 = arith.constant 0 : i32
    %c0_i32_1 = arith.constant 0 : i32
    return %arg0, %c0_i32, %c0_i32_0 : i32, i32, i32
  }
}

</mosaic_0001>

<llo_original>
// kernel: layer_norm.1
$region0: #{layer_norm.1}
  #allocation0 [shape = 'u32[]', space=smem, size = 0x4, offset = 0x4, fixed_abs, tag = 'smem constant byte address 0x4 - core index']
  #allocation1 [shape = 'u32[72,128]{1,0:T(1,128)}', space=vmem, size = 0x9000, scoped, tag = 'internal scratch']
  %s0 = inlined_call_operand.vmem [shape: f32[2,4,256], index: 0, kind: input, shape index: {}]
  %s1 = inlined_call_operand.vmem [shape: f32[1,4,1], index: 1, kind: input, shape index: {}]
  %s2 = inlined_call_operand.vmem [shape: f32[1,4,1], index: 2, kind: input, shape index: {}]
  %s3 = inlined_call_operand.vmem [shape: f32[2,4,256], index: 3, kind: output, shape index: {}]
  %s4 = sld [smem:[#allocation0]]
  $region45: #{layer_norm.1} parent=0
    _
  %s6 = ssub.s32 1, %s4
  %s7 = scalar_select 0, %s6, %s4
  loop: start=0, step=1, limit=4
  $region2: #{layer_norm.1} parent=0 // loop_pre_header
    _
  $region3: #{layer_norm.1} parent=0 // loop_header
    %s9 = sphi 0, %s13
    %p10 = scmp.ge.s32.totalorder %s9, 4
    %s19 = sphi 0, %s21
    %s22 = sphi 0, %s19
    %s23 = sphi 0, %s22
    %s39 = sphi 0, %s23
    %s43 = sphi 0, %s43
    %s45 = sphi 0, %s43
    %s46 = sphi 0, %s45
    %s60 = sphi 0, %s46
    %s64 = sphi 0, %s64
    %s66 = sphi 0, %s64
    %s67 = sphi 0, %s66
    %s81 = sphi 0, %s67
    %s87 = sphi 0, %s89
    %s90 = sphi 0, %s87
    %s91 = sphi 0, %s90
    %s107 = sphi 0, %s91
  $region4: #{layer_norm.1} parent=0 // loop_header_branch
    %12 = sbr.rel (%p10) target = $region8
  $region5: #{layer_norm.1} parent=0 // loop_body
    %s14 = ssub.s32 %s9, 1
    %s15 = ssub.s32 %s9, 2
    %s16 = sadd.s32 %s9, 1
    %s17 = ssub.s32 %s9, %s16
    %p18 = scmp.eq.s32.totalorder %s17, 0
    %s20 = sadd.s32 %s19, 1
    %s21 = scalar_select %p18, %s19, %s20
    %p24 = pneg %p18
    %p25 = scmp.eq.s32.totalorder %s9, 1
    %p26 = por %p24, %p25
    %p27 = scmp.ne.s32.totalorder %s19, %s22
    %p28 = scmp.eq.s32.totalorder %s9, 0
    %p29 = por %p27, %p28
    %p30 = scmp.ne.s32.totalorder %s19, %s22
    %p31 = scmp.eq.s32.totalorder %s14, 1
    %p32 = por %p30, %p31
    %p33 = scmp.ne.s32.totalorder %s22, %s23
    %p34 = scmp.eq.s32.totalorder %s14, 0
    %p35 = por %p33, %p34
    %p36 = scmp.ne.s32.totalorder %s22, %s23
    %p37 = scmp.eq.s32.totalorder %s15, 1
    %p38 = por %p36, %p37
    %p40 = scmp.ne.s32.totalorder %s23, %s39
    %p41 = scmp.eq.s32.totalorder %s15, 0
    %p42 = por %p40, %p41
    %s44 = sadd.s32 %s43, 1
    %p47 = scmp.eq.s32.totalorder %s9, 1
    %p48 = scmp.ne.s32.totalorder %s43, %s45
    %p49 = scmp.eq.s32.totalorder %s9, 0
    %p50 = por %p48, %p49
    %p51 = scmp.ne.s32.totalorder %s43, %s45
    %p52 = scmp.eq.s32.totalorder %s14, 1
    %p53 = por %p51, %p52
    %p54 = scmp.ne.s32.totalorder %s45, %s46
    %p55 = scmp.eq.s32.totalorder %s14, 0
    %p56 = por %p54, %p55
    %p57 = scmp.ne.s32.totalorder %s45, %s46
    %p58 = scmp.eq.s32.totalorder %s15, 1
    %p59 = por %p57, %p58
    %p61 = scmp.ne.s32.totalorder %s46, %s60
    %p62 = scmp.eq.s32.totalorder %s15, 0
    %p63 = por %p61, %p62
    %s65 = sadd.s32 %s64, 1
    %p68 = scmp.eq.s32.totalorder %s9, 1
    %p69 = scmp.ne.s32.totalorder %s64, %s66
    %p70 = scmp.eq.s32.totalorder %s9, 0
    %p71 = por %p69, %p70
    %p72 = scmp.ne.s32.totalorder %s64, %s66
    %p73 = scmp.eq.s32.totalorder %s14, 1
    %p74 = por %p72, %p73
    %p75 = scmp.ne.s32.totalorder %s66, %s67
    %p76 = scmp.eq.s32.totalorder %s14, 0
    %p77 = por %p75, %p76
    %p78 = scmp.ne.s32.totalorder %s66, %s67
    %p79 = scmp.eq.s32.totalorder %s15, 1
    %p80 = por %p78, %p79
    %p82 = scmp.ne.s32.totalorder %s67, %s81
    %p83 = scmp.eq.s32.totalorder %s15, 0
    %p84 = por %p82, %p83
    %s85 = ssub.s32 %s9, %s16
    %p86 = scmp.eq.s32.totalorder %s85, 0
    %s88 = sadd.s32 %s87, 1
    %s89 = scalar_select %p86, %s87, %s88
    %p92 = pneg %p86
    %p93 = scmp.eq.s32.totalorder %s9, 1
    %p94 = por %p92, %p93
    %p95 = scmp.ne.s32.totalorder %s87, %s90
    %p96 = scmp.eq.s32.totalorder %s9, 0
    %p97 = por %p95, %p96
    %p98 = scmp.ne.s32.totalorder %s87, %s90
    %p99 = scmp.eq.s32.totalorder %s14, 1
    %p100 = por %p98, %p99
    %p101 = scmp.ne.s32.totalorder %s90, %s91
    %p102 = scmp.eq.s32.totalorder %s14, 0
    %p103 = por %p101, %p102
    %p104 = scmp.ne.s32.totalorder %s90, %s91
    %p105 = scmp.eq.s32.totalorder %s15, 1
    %p106 = por %p104, %p105
    %p108 = scmp.ne.s32.totalorder %s91, %s107
    %p109 = scmp.eq.s32.totalorder %s15, 0
    %p110 = por %p108, %p109
    %p111 = scmp.le.s32.totalorder 1, %s9
    %p112 = scmp.lt.s32.totalorder %s9, 3
    %p113 = pnand %p111, %p112
    %p114 = pneg %p113
    // Predicated region
    $region9: #{layer_norm.1} parent=5 // pred_check
      _
    $region10: #{layer_norm.1} parent=5 // pred_check_branch
      %116 = sbr.rel (%p113) target = $region12
    $region11: #{layer_norm.1} parent=5 // pred_region
      %s117 = ssub.s32 %s9, 1
      // Predicated region
      $region13: #{layer_norm.1} parent=11 // pred_check
        %p118 = pneg %p56
      $region14: #{layer_norm.1} parent=11 // pred_check_branch
        %120 = sbr.rel (%p118) target = $region16
      $region15: #{layer_norm.1} parent=11 // pred_region
        _
      $region16: #{layer_norm.1} parent=11 // pred_fallthru
        _
      // Predicated region
      $region17: #{layer_norm.1} parent=11 // pred_check
        %p121 = pneg %p77
      $region18: #{layer_norm.1} parent=11 // pred_check_branch
        %123 = sbr.rel (%p121) target = $region20
      $region19: #{layer_norm.1} parent=11 // pred_region
        _
      $region20: #{layer_norm.1} parent=11 // pred_fallthru
        _
    $region12: #{layer_norm.1} parent=5 // pred_fallthru
      _
    %p124 = scmp.lt.s32.totalorder %s9, 2
    // Predicated region
    $region21: #{layer_norm.1} parent=5 // pred_check
      %p125 = pneg %p124
    $region22: #{layer_norm.1} parent=5 // pred_check_branch
      %127 = sbr.rel (%p125) target = $region24
    $region23: #{layer_norm.1} parent=5 // pred_region
      // Predicated region
      $region25: #{layer_norm.1} parent=23 // pred_check
        %p128 = pneg %p29
      $region26: #{layer_norm.1} parent=23 // pred_check_branch
        %130 = sbr.rel (%p128) target = $region28
      $region27: #{layer_norm.1} parent=23 // pred_region
        %p131 = scmp.lt.s32.totalorder %s9, 1
        %s132 = scalar_select %p131, %s9, 1
        %s133 = smul.addr %s132, 2
        %s134 = smul.addr %s133, 4
        %s135 = scalar_lea.vmem %s0, %s134
      $region28: #{layer_norm.1} parent=23 // pred_fallthru
        _
    $region24: #{layer_norm.1} parent=5 // pred_fallthru
      _
    %p136 = scmp.le.s32.totalorder 1, %s9
    %p137 = scmp.lt.s32.totalorder %s9, 3
    %p138 = pnand %p136, %p137
    %p139 = pneg %p138
    // Predicated region
    $region29: #{layer_norm.1} parent=5 // pred_check
      _
    $region30: #{layer_norm.1} parent=5 // pred_check_branch
      %141 = sbr.rel (%p138) target = $region32
    $region31: #{layer_norm.1} parent=5 // pred_region
      %s142 = ssub.s32 %s9, 1
      %p143 = scmp.lt.s32.totalorder %s14, 1
      %s144 = scalar_select %p143, %s14, 1
      %s145 = smul.addr %s144, 2
      %s146 = smul.addr %s145, 4
      %s147 = scalar_lea.vmem %s0, %s146
      %p148 = pneg %p35
      %p149 = pneg %p32
      %p150 = pneg %p56
      %p151 = pneg %p53
      %p152 = pneg %p77
      %p153 = pneg %p74
      %p154 = pneg %p103
      %p155 = pneg %p100
      %p156 = scmp.lt.s32.totalorder %s14, 1
      %s157 = scalar_select %p156, %s14, 1
      %s158 = smul.addr %s157, 2
      %s159 = smul.addr %s158, 4
      %s160 = scalar_lea.vmem %s3, %s159
      %p161 = scmp.lt.s32.totalorder %s14, 1
      %s162 = scalar_select %p161, %s14, 1
      %s163 = smul.addr %s162, 2
      %s164 = smul.addr %s163, 4
      %s165 = scalar_lea.vmem %s0, %s164
      %p166 = scmp.lt.s32.totalorder %s14, 1
      %s167 = scalar_select %p166, %s14, 1
      %s168 = smul.addr %s167, 2
      %s169 = smul.addr %s168, 4
      %s170 = scalar_lea.vmem %s3, %s169
      %v171 = vld [vmem:[%s165] sm:$0xff]
      %173 = vst [vmem:[#allocation1] ss:$2 sm:$0xff] %v171
      %v174 = vld.sshfl [vmem:[#allocation1] sm:$0xff pattern:$0x75316420]
      %v175 = vld.sshfl [vmem:[#allocation1 + $0x8] sm:$0xff pattern:$0x75316420]
      %vm178 = vcmask 1043456
      %v179 = vsel %vm178, %v174, 0.0
      %v180 = vrot.slane %v179, 4
      %v181 = vadd.f32 %v179, %v180
      %v182 = vrot.slane %v181, 2
      %v183 = vadd.f32 %v181, %v182
      %v184 = vrot.slane %v183, 1
      %v185 = vadd.f32 %v183, %v184
      %v186 = vsel %vm178, %v175, 0.0
      %v187 = vrot.slane %v186, 4
      %v188 = vadd.f32 %v186, %v187
      %v189 = vrot.slane %v188, 2
      %v190 = vadd.f32 %v188, %v189
      %v191 = vrot.slane %v190, 1
      %v192 = vadd.f32 %v190, %v191
      %v193 = vmul.f32 %v185, 0.25
      %v194 = vmul.f32 %v192, 0.25
      %v197 = vrot.slane %v194, 4
      %v198 = vsel %vm178, %v193, %v197
      %v200 = vsub.f32 %v171, %v198
      %v201 = vmul.f32 %v200, %v200
      %203 = vst [vmem:[#allocation1] ss:$2 sm:$0xff] %v201
      %v204 = vld.sshfl [vmem:[#allocation1] sm:$0xff pattern:$0x75316420]
      %v205 = vld.sshfl [vmem:[#allocation1 + $0x8] sm:$0xff pattern:$0x75316420]
      %v208 = vsel %vm178, %v204, 0.0
      %v209 = vrot.slane %v208, 4
      %v210 = vadd.f32 %v208, %v209
      %v211 = vrot.slane %v210, 2
      %v212 = vadd.f32 %v210, %v211
      %v213 = vrot.slane %v212, 1
      %v214 = vadd.f32 %v212, %v213
      %v215 = vsel %vm178, %v205, 0.0
      %v216 = vrot.slane %v215, 4
      %v217 = vadd.f32 %v215, %v216
      %v218 = vrot.slane %v217, 2
      %v219 = vadd.f32 %v217, %v218
      %v220 = vrot.slane %v219, 1
      %v221 = vadd.f32 %v219, %v220
      %v222 = vmul.f32 %v214, 0.25
      %v223 = vmul.f32 %v221, 0.25
      %v224 = vadd.f32 %v222, 1e-05
      %v225 = vadd.f32 %v223, 1e-05
      %v226 = vrsqrt.pop %v224
      %v227 = vmul.f32 %v226, %v224
      %v228 = vmul.f32 %v227, %v226
      %v229 = vmul.f32 0.5, %v228
      %v230 = vsub.f32 1.5, %v229
      %v231 = vmul.f32 %v226, %v230
      %vm232 = vweird.f32 %v224
      %vm233 = vweird.f32 %v226
      %vm234 = vmor %vm232, %vm233
      %v235 = vsel %vm234, %v226, %v231
      %v236 = vrsqrt.pop %v225
      %v237 = vmul.f32 %v236, %v225
      %v238 = vmul.f32 %v237, %v236
      %v239 = vmul.f32 0.5, %v238
      %v240 = vsub.f32 1.5, %v239
      %v241 = vmul.f32 %v236, %v240
      %vm242 = vweird.f32 %v225
      %vm243 = vweird.f32 %v236
      %vm244 = vmor %vm242, %vm243
      %v245 = vsel %vm244, %v236, %v241
      %v246 = vld [vmem:[%s1] sm:$0xf]
      %248 = vset.pattern.permute.xlu0 0
      %249 = vperm.xlu0 %248, %v246
      %v250 = vpop.permute.xlu0 %249
      %v252 = vmul.f32 %v235, %v250
      %v253 = vmul.f32 %v245, %v250
      %v256 = vrot.slane %v253, 4
      %v257 = vsel %vm178, %v252, %v256
      %v259 = vmul.f32 %v200, %v257
      %v260 = vld [vmem:[%s2] sm:$0xf]
      %262 = vset.pattern.permute.xlu0 0
      %263 = vperm.xlu0 %262, %v260
      %v264 = vpop.permute.xlu0 %263
      %v266 = vunpack.c.l.s4 839922192
      %v267 = vunpack.c.0.s8 %v266
      %v268 = vperm.slane %v264, %v267
      %v270 = vadd.f32 %v259, %v268
      %271 = vst [vmem:[%s170] sm:$0xff] %v270
      %p272 = scmp.lt.s32.totalorder %s14, 1
      %s273 = scalar_select %p272, %s14, 1
      %s274 = smul.addr %s273, 2
      %s275 = smul.addr %s274, 4
      %s276 = scalar_lea.vmem %s3, %s275
      // Predicated region
      $region33: #{layer_norm.1} parent=31 // pred_check
        %p277 = pneg %p100
      $region34: #{layer_norm.1} parent=31 // pred_check_branch
        %279 = sbr.rel (%p277) target = $region36
      $region35: #{layer_norm.1} parent=31 // pred_region
        _
      $region36: #{layer_norm.1} parent=31 // pred_fallthru
        _
    $region32: #{layer_norm.1} parent=5 // pred_fallthru
      _
    %p280 = scmp.le.s32.totalorder 2, %s9
    // Predicated region
    $region37: #{layer_norm.1} parent=5 // pred_check
      %p281 = pneg %p280
    $region38: #{layer_norm.1} parent=5 // pred_check_branch
      %283 = sbr.rel (%p281) target = $region40
    $region39: #{layer_norm.1} parent=5 // pred_region
      %s284 = ssub.s32 %s9, 2
      // Predicated region
      $region41: #{layer_norm.1} parent=39 // pred_check
        %p285 = pneg %p106
      $region42: #{layer_norm.1} parent=39 // pred_check_branch
        %287 = sbr.rel (%p285) target = $region44
      $region43: #{layer_norm.1} parent=39 // pred_region
        %p288 = scmp.lt.s32.totalorder %s15, 1
        %s289 = scalar_select %p288, %s15, 1
        %s290 = smul.addr %s289, 2
        %s291 = smul.addr %s290, 4
        %s292 = scalar_lea.vmem %s3, %s291
      $region44: #{layer_norm.1} parent=39 // pred_fallthru
        _
    $region40: #{layer_norm.1} parent=5 // pred_fallthru
      _
  $region6: #{layer_norm.1} parent=0 // loop_footer
    %s13 = sadd.s32 1, %s9
  $region7: #{layer_norm.1} parent=0 // loop_footer_branch
    %8 = sbr.rel target = $region3
  $region8: #{layer_norm.1} parent=0 // loop_exit
    _

</llo_original>
